<compile_context>
chip_gen: v7x
topology: tpu7x:2x2x1
jax: 0.10.0
libtpu: 0.0.40
codegen_flags: <defaults>
</compile_context>

<pallas_src>
import functools

import jax
import jax.numpy as jnp
from jax.experimental import pallas as pl
from jax.experimental.pallas import tpu as pltpu

EPS = 1e-5


# ----------------------------------------------------------------------------------------
# Pallas kernels: fused matmul + affine (+ residual) (+ ReLU), bf16 out
# ----------------------------------------------------------------------------------------
def _matmul_affine_kernel(x_ref, w_ref, s_ref, b_ref, o_ref, *, relu):
    acc = jnp.dot(x_ref[...], w_ref[...], preferred_element_type=jnp.float32)
    y = acc * s_ref[...] + b_ref[...]
    if relu:
        y = jnp.maximum(y, 0.0)
    o_ref[...] = y.astype(o_ref.dtype)


def _matmul_affine_res_kernel(x_ref, w_ref, s_ref, b_ref, r_ref, o_ref, *, relu):
    acc = jnp.dot(x_ref[...], w_ref[...], preferred_element_type=jnp.float32)
    y = acc * s_ref[...] + b_ref[...] + r_ref[...].astype(jnp.float32)
    if relu:
        y = jnp.maximum(y, 0.0)
    o_ref[...] = y.astype(o_ref.dtype)


def _pick_tm(M):
    # >= 2 grid steps for larger M so the "parallel" axis can shard across v7x's two
    # TensorCores and pipeline HBM traffic.  tm always divides M (no ragged tail).
    if M % 8 != 0 or M <= 256:
        return M
    for cand in (256, 512, 128, 64, 32, 16, 8):
        if M % cand == 0:
            return cand
    return M


def _vmem_limit_bytes(tm, K, N, has_res):
    # double-buffered bf16 blocks for x / w / out (+ residual), plus f32 scale/bias,
    # 2x safety margin + 4 MiB compiler scratch, clamped well under v7x's 64 MiB.
    blocks = tm * K + K * N + tm * N + (tm * N if has_res else 0)
    need = 2 * 2 * blocks + 4 * 4 * N
    return int(min(max(2 * need + (4 << 20), 16 << 20), 48 << 20))


def fused_matmul(x, w, scale, bias, residual, *, relu):
    """out_bf16 = act((x @ w) * scale + bias [+ residual]); x:(M,K), w:(K,N)."""
    M, K = x.shape
    N = w.shape[1]
    x = x.astype(jnp.bfloat16)
    w = w.astype(jnp.bfloat16)
    scale2 = scale.reshape(1, N).astype(jnp.float32)
    bias2 = bias.reshape(1, N).astype(jnp.float32)

    tm = _pick_tm(M)
    grid = (M // tm,)

    in_specs = [
        pl.BlockSpec((tm, K), lambda i: (i, 0)),
        pl.BlockSpec((K, N), lambda i: (0, 0)),
        pl.BlockSpec((1, N), lambda i: (0, 0)),
        pl.BlockSpec((1, N), lambda i: (0, 0)),
    ]
    args = [x, w, scale2, bias2]
    if residual is not None:
        in_specs.append(pl.BlockSpec((tm, N), lambda i: (i, 0)))
        args.append(residual.astype(jnp.bfloat16))
        kernel = functools.partial(_matmul_affine_res_kernel, relu=relu)
    else:
        kernel = functools.partial(_matmul_affine_kernel, relu=relu)

    return pl.pallas_call(
        kernel,
        out_shape=jax.ShapeDtypeStruct((M, N), jnp.bfloat16),
        grid=grid,
        in_specs=in_specs,
        out_specs=pl.BlockSpec((tm, N), lambda i: (i, 0)),
        compiler_params=pltpu.CompilerParams(
            dimension_semantics=("parallel",),
            vmem_limit_bytes=_vmem_limit_bytes(tm, K, N, residual is not None),
        ),
    )(*args)


# ----------------------------------------------------------------------------------------
# Conv / Deconv wrappers (im2col glue in JAX, fused matmul in Pallas)
# ----------------------------------------------------------------------------------------
@functools.partial(jax.jit, static_argnames=("kh", "kw", "sh", "sw", "ph", "pw", "relu"))
def conv2d_nhwc(x, wf, scale, bias, residual, *, kh, kw, sh, sw, ph, pw, relu):
    """x:(B,H,W,Cin) NHWC. wf:(kh*kw*Cin, Cout) bf16 (grouped convs are block-diag)."""
    B, H, W_, Cin = x.shape
    N = wf.shape[1]
    xb = x.astype(jnp.bfloat16)
    if kh == 1 and kw == 1 and sh == 1 and sw == 1 and ph == 0 and pw == 0:
        Ho, Wo = H, W_
        patches = xb.reshape(B * Ho * Wo, Cin)
    else:
        # TODO(synk): replace with an in-kernel K-reduction over taps (no HBM im2col).
        xp = jnp.pad(xb, ((0, 0), (ph, ph), (pw, pw), (0, 0)))
        Hp, Wp = H + 2 * ph, W_ + 2 * pw
        Ho = (Hp - kh) // sh + 1
        Wo = (Wp - kw) // sw + 1
        cols = [
            xp[:, i:i + sh * Ho:sh, j:j + sw * Wo:sw, :]
            for i in range(kh)
            for j in range(kw)
        ]
        patches = jnp.concatenate(cols, axis=-1).reshape(B * Ho * Wo, kh * kw * Cin)
    res2 = None if residual is None else residual.reshape(B * Ho * Wo, N)
    y = fused_matmul(patches, wf, scale, bias, res2, relu=relu)
    return y.reshape(B, Ho, Wo, N)


@jax.jit
def deconv2x2_nhwc(x, wf, s4, b4):
    """ConvTranspose2d kernel=2 stride=2 padding=0; wf:(Cin, 4*Cout) bf16, col=(di,dj,o)."""
    B, H, W_, Cin = x.shape
    Cout = wf.shape[1] // 4
    y = fused_matmul(x.reshape(B * H * W_, Cin), wf, s4, b4, None, relu=False)
    # TODO(synk): fold the (2,2)-tap interleave below into the kernel / consumer gather.
    y = y.reshape(B, H, W_, 2, 2, Cout).transpose(0, 1, 3, 2, 4, 5)
    return y.reshape(B, 2 * H, 2 * W_, Cout)


def avg_pool(x, k):
    B, H, W_, C = x.shape
    y = x.astype(jnp.float32).reshape(B, H // k, k, W_ // k, k, C).mean(axis=(2, 4))
    return y.astype(x.dtype)


# ----------------------------------------------------------------------------------------
# Deterministic parameter construction (all weight prep hoisted here, done once)
# ----------------------------------------------------------------------------------------
class ParamGen:
    def __init__(self, seed=0):
        self.key = jax.random.PRNGKey(seed)
        self.count = 0

    def normal(self, shape, std):
        self.count += 1
        k = jax.random.fold_in(self.key, self.count)
        return jax.random.normal(k, shape, jnp.float32) * std


def _pair(v):
    return (v, v) if isinstance(v, int) else (v[0], v[1])


def _fold_bn(pg, cout, conv_bias, has_bn):
    if has_bn:
        gamma = 1.0 + pg.normal((cout,), 0.1)
        beta = pg.normal((cout,), 0.1)
        mean = jnp.zeros((cout,), jnp.float32)
        var = jnp.ones((cout,), jnp.float32)
        s = gamma / jnp.sqrt(var + EPS)
        b_eff = beta + s * (conv_bias - mean)
    else:
        s = jnp.ones((cout,), jnp.float32)
        b_eff = conv_bias
    return s, b_eff


def gen_conv_raw(pg, cin, cout, kernel_size=3, stride=1, padding=1, groups=1,
                 has_bn=True, has_relu=True):
    kh, kw = _pair(kernel_size)
    sh, sw = _pair(stride)
    ph, pw = _pair(padding)
    fan_in = (cin // groups) * kh * kw
    w = pg.normal((cout, cin // groups, kh, kw), 0.5 * (2.0 / fan_in) ** 0.5)
    b = pg.normal((cout,), 0.01)
    s, b_eff = _fold_bn(pg, cout, b, has_bn)
    if groups > 1:
        # Grouped conv -> block-diagonal dense weight (single lane-dense matmul).
        # TODO(synk): for groups=8 this inflates weight DMA ~8x; per-group grid blocks
        # would need 128-lane padded output tiles.
        cin_g, cout_g = cin // groups, cout // groups
        wd = jnp.zeros((cout, cin, kh, kw), jnp.float32)
        for g in range(groups):
            wd = wd.at[g * cout_g:(g + 1) * cout_g,
                       g * cin_g:(g + 1) * cin_g].set(w[g * cout_g:(g + 1) * cout_g])
        w = wd
    return dict(w=w, s=s, b=b_eff, kh=kh, kw=kw, sh=sh, sw=sw, ph=ph, pw=pw,
                relu=has_relu)


def pack_conv(raw):
    w = raw["w"]
    cout, cin = w.shape[0], w.shape[1]
    kh, kw = raw["kh"], raw["kw"]
    # im2col weight layout: row index = (tap_i*kw + tap_j)*Cin + c  -> matches patch build.
    wf = jnp.transpose(w, (2, 3, 1, 0)).reshape(kh * kw * cin, cout)
    return dict(kind="conv", wf=wf.astype(jnp.bfloat16),
                scale=raw["s"].reshape(1, cout).astype(jnp.float32),
                bias=raw["b"].reshape(1, cout).astype(jnp.float32),
                kh=kh, kw=kw, sh=raw["sh"], sw=raw["sw"], ph=raw["ph"], pw=raw["pw"],
                relu=raw["relu"])


def init_conv(pg, cin, cout, **kw):
    return pack_conv(gen_conv_raw(pg, cin, cout, **kw))


def _merge_conv_concat_n(ra, rb):
    """Both branches consume the SAME input; outputs concatenated along channels."""
    out = dict(ra)
    out["w"] = jnp.concatenate([ra["w"], rb["w"]], axis=0)
    out["s"] = jnp.concatenate([ra["s"], rb["s"]], axis=0)
    out["b"] = jnp.concatenate([ra["b"], rb["b"]], axis=0)
    return out


def _merge_conv_blockdiag(ra, rb):
    """Input AND output channel-concatenated; block-diag keeps branches independent."""
    co_a, ci_a = ra["w"].shape[0], ra["w"].shape[1]
    co_b, ci_b = rb["w"].shape[0], rb["w"].shape[1]
    kh, kw = ra["kh"], ra["kw"]
    w = jnp.zeros((co_a + co_b, ci_a + ci_b, kh, kw), jnp.float32)
    w = w.at[:co_a, :ci_a].set(ra["w"])
    w = w.at[co_a:, ci_a:].set(rb["w"])
    out = dict(ra)
    out["w"] = w
    out["s"] = jnp.concatenate([ra["s"], rb["s"]], axis=0)
    out["b"] = jnp.concatenate([ra["b"], rb["b"]], axis=0)
    return out


def gen_deconv_raw(pg, cin, cout, has_bn=True):
    w = pg.normal((cin, cout, 2, 2), 0.5 * (2.0 / (cin * 4)) ** 0.5)
    b = pg.normal((cout,), 0.01)
    s, b_eff = _fold_bn(pg, cout, b, has_bn)
    return dict(w=w, s=s, b=b_eff)


def _merge_deconv_blockdiag(ra, rb):
    ci_a, co_a = ra["w"].shape[0], ra["w"].shape[1]
    ci_b, co_b = rb["w"].shape[0], rb["w"].shape[1]
    w = jnp.zeros((ci_a + ci_b, co_a + co_b, 2, 2), jnp.float32)
    w = w.at[:ci_a, :co_a].set(ra["w"])
    w = w.at[ci_a:, co_a:].set(rb["w"])
    return dict(w=w, s=jnp.concatenate([ra["s"], rb["s"]]),
                b=jnp.concatenate([ra["b"], rb["b"]]))


def pack_deconv(raw):
    w = raw["w"]
    cin, cout = w.shape[0], w.shape[1]
    wf = jnp.transpose(w, (0, 2, 3, 1)).reshape(cin, 4 * cout)  # col = (di, dj, o)
    s4 = jnp.tile(raw["s"], 4).reshape(1, 4 * cout).astype(jnp.float32)
    b4 = jnp.tile(raw["b"], 4).reshape(1, 4 * cout).astype(jnp.float32)
    return dict(kind="deconv", wf=wf.astype(jnp.bfloat16), scale=s4, bias=b4)


def run_conv(p, x, residual=None, relu=None):
    r = p["relu"] if relu is None else relu
    return conv2d_nhwc(x, p["wf"], p["scale"], p["bias"], residual,
                       kh=p["kh"], kw=p["kw"], sh=p["sh"], sw=p["sw"],
                       ph=p["ph"], pw=p["pw"], relu=r)


def run_deconv(p, x):
    return deconv2x2_nhwc(x, p["wf"], p["scale"], p["bias"])


# ----------------------------------------------------------------------------------------
# resnext_block / Encoder / conv_block / refine_block / UNet
# ----------------------------------------------------------------------------------------
def init_resnext(pg, cin, cout, stride, groups, has_proj):
    bottleneck = cout // 4
    assert bottleneck % groups == 0 and (bottleneck // groups) % 4 == 0
    d = dict(
        shrink=init_conv(pg, cin, bottleneck, kernel_size=1, padding=0),
        conv3=init_conv(pg, bottleneck, bottleneck, kernel_size=3, stride=stride,
                        padding=1, groups=groups),
        expand=init_conv(pg, bottleneck, cout, kernel_size=1, padding=0, has_relu=False),
        has_proj=has_proj, stride=stride,
    )
    if has_proj:
        d["shortcut"] = init_conv(pg, cin, cout, kernel_size=1, padding=0, has_relu=False)
    return d


def run_resnext(d, x):
    # TODO(synk): fuse shrink -> grouped 3x3 -> expand into a single pallas_call with
    # VMEM-resident intermediates (removes two HBM round trips per block).
    proj = x
    if d["has_proj"]:
        if d["stride"] == 2:
            proj = avg_pool(proj, 2)
        proj = run_conv(d["shortcut"], proj)
    h = run_conv(d["shrink"], x)
    h = run_conv(d["conv3"], h)
    # residual add + post-add ReLU fused into the expand conv's epilogue
    return run_conv(d["expand"], h, residual=proj, relu=True)


def init_encoder(pg, in_channels, base_ch=32):
    e = dict(conv00=init_conv(pg, in_channels, base_ch // 2, stride=2))
    e["g03"] = [init_resnext(pg, base_ch // 2, base_ch * 2, 2, 2, True)] + \
               [init_resnext(pg, base_ch * 2, base_ch * 2, 1, 2, False) for _ in range(2)]
    e["g3"] = [init_resnext(pg, base_ch * 2, base_ch * 4, 2, 2, True)] + \
              [init_resnext(pg, base_ch * 4, base_ch * 4, 1, 2, False) for _ in range(3)]
    e["g4"] = [init_resnext(pg, base_ch * 4, base_ch * 8, 2, 4, True)] + \
              [init_resnext(pg, base_ch * 8, base_ch * 8, 1, 4, False) for _ in range(6)]
    e["g5"] = [init_resnext(pg, base_ch * 8, base_ch * 16, 2, 8, True)] + \
              [init_resnext(pg, base_ch * 16, base_ch * 16, 1, 8, False) for _ in range(6)]
    e["g6"] = [init_resnext(pg, base_ch * 16, base_ch * 32, 2, 8, True)] + \
              [init_resnext(pg, base_ch * 32, base_ch * 32, 1, 8, False) for _ in range(6)]
    return e


def run_encoder(e, x):
    x0 = run_conv(e["conv00"], x)
    x01 = x0
    for blk in e["g03"]:
        x01 = run_resnext(blk, x01)
    pool01 = avg_pool(x0, 32)
    x1 = x01
    for blk in e["g3"]:
        x1 = run_resnext(blk, x1)
    pool1 = avg_pool(x01, 16)
    x2 = x1
    for blk in e["g4"]:
        x2 = run_resnext(blk, x2)
    pool2 = avg_pool(x1, 8)
    x3 = x2
    for blk in e["g5"]:
        x3 = run_resnext(blk, x3)
    pool3 = avg_pool(x2, 4)
    x4 = x3
    for blk in e["g6"]:
        x4 = run_resnext(blk, x4)
    pool4 = avg_pool(x3, 2)
    x4 = jnp.concatenate([pool01, pool1, pool2, pool3, pool4, x4], axis=-1)
    return x4, x3, x2, x1, x01, x0


def run_conv_block(d, x, extra=None):
    # result = conv01(conv00(x)) + conv11(conv10(x)) [+ extra]  (adds fused into epilogues)
    x0 = run_conv(d["conv01"], run_conv(d["conv00"], x), residual=extra)
    x1 = run_conv(d["conv11"], run_conv(d["conv10"], x), residual=x0)
    return x1


def run_refine(d, x):
    h = run_conv(d["r0"], x)
    return run_conv(d["r1"], h, residual=x)   # residual fused, no relu


def init_unet(pg, in_channels):
    u = dict(encoder=init_encoder(pg, in_channels))
    is_cb = [True, True, True, False, False, False]
    encdr_ch = [2000, 512, 256, 128, 64, 16]
    in_ch = [128, 128, 64, 16, 8, 8]
    out_ch = [128, 64, 16, 8, 8, 8]

    # Generate raw per-branch params (mirrors the reference layer structure), then merge
    # the two decoder branches along the channel axis (one fused decoder pass).
    raws = {}
    for prefix in ("", "valid_"):
        for idx in range(6):
            ec, ic, oc = encdr_ch[idx], in_ch[idx], out_ch[idx]
            if is_cb[idx]:
                raws[f"{prefix}score{idx}"] = dict(
                    conv00=gen_conv_raw(pg, ec, ic, kernel_size=(1, 3), padding=(0, 1)),
                    conv01=gen_conv_raw(pg, ic, ic, kernel_size=(3, 1), padding=(1, 0),
                                        has_relu=False),
                    conv10=gen_conv_raw(pg, ec, ic, kernel_size=(3, 1), padding=(1, 0)),
                    conv11=gen_conv_raw(pg, ic, ic, kernel_size=(1, 3), padding=(0, 1),
                                        has_relu=False),
                )
            else:
                raws[f"{prefix}score{idx}"] = gen_conv_raw(pg, ec, ic, has_relu=False)
            raws[f"{prefix}refine{idx}"] = dict(
                r0=gen_conv_raw(pg, ic, ic, kernel_size=3, padding=1),
                r1=gen_conv_raw(pg, ic, ic, kernel_size=3, padding=1, has_relu=False),
            )
            if idx < 5:
                raws[f"{prefix}resize{idx}"] = gen_deconv_raw(pg, ic, oc, has_bn=True)
            else:
                raws[f"{prefix}resize{idx}"] = gen_deconv_raw(pg, ic, 1, has_bn=False)

    for idx in range(6):
        m, v = raws[f"score{idx}"], raws[f"valid_score{idx}"]
        if is_cb[idx]:
            u[f"score{idx}"] = dict(
                kind="conv_block",
                conv00=pack_conv(_merge_conv_concat_n(m["conv00"], v["conv00"])),
                conv01=pack_conv(_merge_conv_blockdiag(m["conv01"], v["conv01"])),
                conv10=pack_conv(_merge_conv_concat_n(m["conv10"], v["conv10"])),
                conv11=pack_conv(_merge_conv_blockdiag(m["conv11"], v["conv11"])),
            )
        else:
            u[f"score{idx}"] = pack_conv(_merge_conv_concat_n(m, v))
        mr, vr = raws[f"refine{idx}"], raws[f"valid_refine{idx}"]
        u[f"refine{idx}"] = dict(
            r0=pack_conv(_merge_conv_blockdiag(mr["r0"], vr["r0"])),
            r1=pack_conv(_merge_conv_blockdiag(mr["r1"], vr["r1"])),
        )
        u[f"resize{idx}"] = pack_deconv(
            _merge_deconv_blockdiag(raws[f"resize{idx}"], raws[f"valid_resize{idx}"]))
    u["out_ch"] = out_ch
    return u


def _run_score(p, x, extra):
    if p.get("kind") == "conv_block":
        return run_conv_block(p, x, extra)
    return run_conv(p, x, residual=extra)   # plain conv (no relu) + skip add fused


def unet_forward(u, data_nchw):
    x = jnp.transpose(data_nchw, (0, 2, 3, 1)).astype(jnp.float32)  # NCHW -> NHWC
    conv4, conv3, conv2, conv1, conv01, conv0 = run_encoder(u["encoder"], x)
    blocks = [conv4, conv3, conv2, conv1, conv01, conv0]

    # Single merged decoder pass; channel layout everywhere is [main | valid].
    up_former = None
    last_fm = None
    for idx in range(6):
        extra = up_former if idx > 0 else None
        up_latter = _run_score(u[f"score{idx}"], blocks[idx], extra)
        up_former = run_refine(u[f"refine{idx}"], up_latter)
        up_former = run_deconv(u[f"resize{idx}"], up_former)
        if idx == len(blocks) - 2:
            last_fm = up_former[..., :u["out_ch"][idx]]   # main-branch half

    pred = jnp.maximum(up_former[..., 0:1].astype(jnp.float32), 0.0)
    valid = jax.nn.sigmoid(up_former[..., 1:2].astype(jnp.float32))
    last_fm = last_fm.astype(jnp.float32)

    to_nchw = lambda t: jnp.transpose(t, (0, 3, 1, 2))
    return to_nchw(pred), to_nchw(valid), to_nchw(last_fm)


# ----------------------------------------------------------------------------------------
if __name__ == "__main__":
    pg = ParamGen(0)
    in_channels = 3
    params = init_unet(pg, in_channels)

    # Spatial size must be a multiple of 64 (the encoder downsamples to H/64 before concat).
    data = jax.random.normal(jax.random.PRNGKey(0), (2, in_channels, 64, 64), jnp.float32)

    pred, valid, last_fm = unet_forward(params, data)
    jax.block_until_ready((pred, valid, last_fm))

    assert pred.shape == (2, 1, 64, 64), pred.shape
    assert valid.shape == (2, 1, 64, 64), valid.shape
    assert last_fm.shape == (2, 8, 32, 32), last_fm.shape
    assert bool(jnp.all(jnp.isfinite(pred)))
    assert bool(jnp.all(jnp.isfinite(valid)))
    assert bool(jnp.all(jnp.isfinite(last_fm)))
    print("KERNEL_OK")
</pallas_src>

<mosaic_0001>
module attributes {stable_mosaic.version = 11 : i64} {
  func.func @_matmul_affine_kernel(%arg0: i32, %arg1: memref<256x27xbf16, #tpu.memory_space<vmem>>, %arg2: memref<27x16xbf16, #tpu.memory_space<vmem>>, %arg3: memref<1x16xf32, #tpu.memory_space<vmem>>, %arg4: memref<1x16xf32, #tpu.memory_space<vmem>>, %arg5: memref<256x16xbf16, #tpu.memory_space<vmem>>) attributes {dimension_semantics = [#tpu.dimension_semantics<parallel>], iteration_bounds = array<i64: 8>, scalar_prefetch = 0 : i64, scratch_operands = 0 : i64, tpu.core_type = #tpu.core_type<tc>, window_params = [{transform_indices = @transform_0, window_bounds = array<i64: 256, 27>}, {pipeline_mode = #tpu.pipeline_mode<synchronous>, transform_indices = @transform_1, window_bounds = array<i64: 27, 16>}, {pipeline_mode = #tpu.pipeline_mode<synchronous>, transform_indices = @transform_2, window_bounds = array<i64: 1, 16>}, {pipeline_mode = #tpu.pipeline_mode<synchronous>, transform_indices = @transform_3, window_bounds = array<i64: 1, 16>}, {transform_indices = @transform_4, window_bounds = array<i64: 256, 16>}]} {
    %c0 = arith.constant 0 : index
    %c0_0 = arith.constant 0 : index
    %0 = vector.load %arg1[%c0, %c0_0] : memref<256x27xbf16, #tpu.memory_space<vmem>>, vector<256x27xbf16>
    %c0_1 = arith.constant 0 : index
    %c0_2 = arith.constant 0 : index
    %1 = vector.load %arg2[%c0_1, %c0_2] : memref<27x16xbf16, #tpu.memory_space<vmem>>, vector<27x16xbf16>
    %cst = arith.constant dense<0.000000e+00> : vector<256x16xf32>
    %2 = tpu.matmul %0, %1, %cst {dimension_numbers = #tpu.dot_dimension_numbers<[1], [0], [0], [1], [0, 0, 1, 1], [], []>} : vector<256x27xbf16>, vector<27x16xbf16>, vector<256x16xf32> -> vector<256x16xf32>
    %c0_3 = arith.constant 0 : index
    %c0_4 = arith.constant 0 : index
    %3 = vector.load %arg3[%c0_3, %c0_4] : memref<1x16xf32, #tpu.memory_space<vmem>>, vector<1x16xf32>
    %4 = vector.broadcast %3 : vector<1x16xf32> to vector<256x16xf32>
    %5 = arith.mulf %2, %4 : vector<256x16xf32>
    %c0_5 = arith.constant 0 : index
    %c0_6 = arith.constant 0 : index
    %6 = vector.load %arg4[%c0_5, %c0_6] : memref<1x16xf32, #tpu.memory_space<vmem>>, vector<1x16xf32>
    %7 = vector.broadcast %6 : vector<1x16xf32> to vector<256x16xf32>
    %8 = arith.addf %5, %7 : vector<256x16xf32>
    %cst_7 = arith.constant 0.000000e+00 : f32
    %9 = vector.broadcast %cst_7 : f32 to vector<256x16xf32>
    %10 = arith.maximumf %8, %9 : vector<256x16xf32>
    %11 = arith.truncf %10 : vector<256x16xf32> to vector<256x16xbf16>
    %c0_8 = arith.constant 0 : index
    %c0_9 = arith.constant 0 : index
    %12 = vector.load %arg5[%c0_8, %c0_9] : memref<256x16xbf16, #tpu.memory_space<vmem>>, vector<256x16xbf16>
    tpu.vector_store %arg5[%c0_8, %c0_9], %11 {strides = array<i32>} : memref<256x16xbf16, #tpu.memory_space<vmem>>, vector<256x16xbf16>,
    return
  }
  func.func @transform_0(%arg0: i32) -> (i32, i32) {
    %c0_i32 = arith.constant 0 : i32
    %c0_i32_0 = arith.constant 0 : i32
    return %arg0, %c0_i32 : i32, i32
  }
  func.func @transform_1(%arg0: i32) -> (i32, i32) {
    %c0_i32 = arith.constant 0 : i32
    %c0_i32_0 = arith.constant 0 : i32
    %c0_i32_1 = arith.constant 0 : i32
    return %c0_i32, %c0_i32_0 : i32, i32
  }
  func.func @transform_2(%arg0: i32) -> (i32, i32) {
    %c0_i32 = arith.constant 0 : i32
    %c0_i32_0 = arith.constant 0 : i32
    %c0_i32_1 = arith.constant 0 : i32
    return %c0_i32, %c0_i32_0 : i32, i32
  }
  func.func @transform_3(%arg0: i32) -> (i32, i32) {
    %c0_i32 = arith.constant 0 : i32
    %c0_i32_0 = arith.constant 0 : i32
    %c0_i32_1 = arith.constant 0 : i32
    return %c0_i32, %c0_i32_0 : i32, i32
  }
  func.func @transform_4(%arg0: i32) -> (i32, i32) {
    %c0_i32 = arith.constant 0 : i32
    %c0_i32_0 = arith.constant 0 : i32
    return %arg0, %c0_i32 : i32, i32
  }
}

</mosaic_0001>

<llo_original>
// kernel: conv2d_nhwc.1
$region0: #{conv2d_nhwc.1}
  #allocation0 [shape = 'u32[]', space=smem, size = 0x4, offset = 0x4, fixed_abs, tag = 'smem constant byte address 0x4 - core index']
  #allocation1 [shape = 'u32[144,128]{1,0:T(1,128)}', space=vmem, size = 0x12000, scoped, tag = 'internal scratch']
  %s0 = inlined_call_operand.vmem [shape: bf16[2048,27], index: 0, kind: input, shape index: {}]
  %s1 = inlined_call_operand.vmem [shape: bf16[27,16], index: 1, kind: input, shape index: {}]
  %s2 = inlined_call_operand.vmem [shape: f32[1,16], index: 2, kind: input, shape index: {}]
  %s3 = inlined_call_operand.vmem [shape: f32[1,16], index: 3, kind: input, shape index: {}]
  %s4 = inlined_call_operand.vmem [shape: bf16[2048,16], index: 4, kind: output, shape index: {}]
  %s5 = sld [smem:[#allocation0]]
  $region49: #{conv2d_nhwc.1} parent=0
    _
  %s7 = ssub.s32 1, %s5
  %s8 = scalar_select 0, %s7, %s5
  loop: start=0, step=1, limit=10
  $region2: #{conv2d_nhwc.1} parent=0 // loop_pre_header
    _
  $region3: #{conv2d_nhwc.1} parent=0 // loop_header
    %s10 = sphi 0, %s14
    %p11 = scmp.ge.s32.totalorder %s10, 10
    %s20 = sphi 0, %s22
    %s23 = sphi 0, %s20
    %s24 = sphi 0, %s23
    %s40 = sphi 0, %s24
    %s44 = sphi 0, %s44
    %s46 = sphi 0, %s44
    %s47 = sphi 0, %s46
    %s61 = sphi 0, %s47
    %s65 = sphi 0, %s65
    %s67 = sphi 0, %s65
    %s68 = sphi 0, %s67
    %s82 = sphi 0, %s68
    %s86 = sphi 0, %s86
    %s88 = sphi 0, %s86
    %s89 = sphi 0, %s88
    %s103 = sphi 0, %s89
    %s109 = sphi 0, %s111
    %s112 = sphi 0, %s109
    %s113 = sphi 0, %s112
    %s129 = sphi 0, %s113
  $region4: #{conv2d_nhwc.1} parent=0 // loop_header_branch
    %13 = sbr.rel (%p11) target = $region8
  $region5: #{conv2d_nhwc.1} parent=0 // loop_body
    %s15 = ssub.s32 %s10, 1
    %s16 = ssub.s32 %s10, 2
    %s17 = sadd.s32 %s10, 1
    %s18 = ssub.s32 %s10, %s17
    %p19 = scmp.eq.s32.totalorder %s18, 0
    %s21 = sadd.s32 %s20, 1
    %s22 = scalar_select %p19, %s20, %s21
    %p25 = pneg %p19
    %p26 = scmp.eq.s32.totalorder %s10, 7
    %p27 = por %p25, %p26
    %p28 = scmp.ne.s32.totalorder %s20, %s23
    %p29 = scmp.eq.s32.totalorder %s10, 0
    %p30 = por %p28, %p29
    %p31 = scmp.ne.s32.totalorder %s20, %s23
    %p32 = scmp.eq.s32.totalorder %s15, 7
    %p33 = por %p31, %p32
    %p34 = scmp.ne.s32.totalorder %s23, %s24
    %p35 = scmp.eq.s32.totalorder %s15, 0
    %p36 = por %p34, %p35
    %p37 = scmp.ne.s32.totalorder %s23, %s24
    %p38 = scmp.eq.s32.totalorder %s16, 7
    %p39 = por %p37, %p38
    %p41 = scmp.ne.s32.totalorder %s24, %s40
    %p42 = scmp.eq.s32.totalorder %s16, 0
    %p43 = por %p41, %p42
    %s45 = sadd.s32 %s44, 1
    %p48 = scmp.eq.s32.totalorder %s10, 7
    %p49 = scmp.ne.s32.totalorder %s44, %s46
    %p50 = scmp.eq.s32.totalorder %s10, 0
    %p51 = por %p49, %p50
    %p52 = scmp.ne.s32.totalorder %s44, %s46
    %p53 = scmp.eq.s32.totalorder %s15, 7
    %p54 = por %p52, %p53
    %p55 = scmp.ne.s32.totalorder %s46, %s47
    %p56 = scmp.eq.s32.totalorder %s15, 0
    %p57 = por %p55, %p56
    %p58 = scmp.ne.s32.totalorder %s46, %s47
    %p59 = scmp.eq.s32.totalorder %s16, 7
    %p60 = por %p58, %p59
    %p62 = scmp.ne.s32.totalorder %s47, %s61
    %p63 = scmp.eq.s32.totalorder %s16, 0
    %p64 = por %p62, %p63
    %s66 = sadd.s32 %s65, 1
    %p69 = scmp.eq.s32.totalorder %s10, 7
    %p70 = scmp.ne.s32.totalorder %s65, %s67
    %p71 = scmp.eq.s32.totalorder %s10, 0
    %p72 = por %p70, %p71
    %p73 = scmp.ne.s32.totalorder %s65, %s67
    %p74 = scmp.eq.s32.totalorder %s15, 7
    %p75 = por %p73, %p74
    %p76 = scmp.ne.s32.totalorder %s67, %s68
    %p77 = scmp.eq.s32.totalorder %s15, 0
    %p78 = por %p76, %p77
    %p79 = scmp.ne.s32.totalorder %s67, %s68
    %p80 = scmp.eq.s32.totalorder %s16, 7
    %p81 = por %p79, %p80
    %p83 = scmp.ne.s32.totalorder %s68, %s82
    %p84 = scmp.eq.s32.totalorder %s16, 0
    %p85 = por %p83, %p84
    %s87 = sadd.s32 %s86, 1
    %p90 = scmp.eq.s32.totalorder %s10, 7
    %p91 = scmp.ne.s32.totalorder %s86, %s88
    %p92 = scmp.eq.s32.totalorder %s10, 0
    %p93 = por %p91, %p92
    %p94 = scmp.ne.s32.totalorder %s86, %s88
    %p95 = scmp.eq.s32.totalorder %s15, 7
    %p96 = por %p94, %p95
    %p97 = scmp.ne.s32.totalorder %s88, %s89
    %p98 = scmp.eq.s32.totalorder %s15, 0
    %p99 = por %p97, %p98
    %p100 = scmp.ne.s32.totalorder %s88, %s89
    %p101 = scmp.eq.s32.totalorder %s16, 7
    %p102 = por %p100, %p101
    %p104 = scmp.ne.s32.totalorder %s89, %s103
    %p105 = scmp.eq.s32.totalorder %s16, 0
    %p106 = por %p104, %p105
    %s107 = ssub.s32 %s10, %s17
    %p108 = scmp.eq.s32.totalorder %s107, 0
    %s110 = sadd.s32 %s109, 1
    %s111 = scalar_select %p108, %s109, %s110
    %p114 = pneg %p108
    %p115 = scmp.eq.s32.totalorder %s10, 7
    %p116 = por %p114, %p115
    %p117 = scmp.ne.s32.totalorder %s109, %s112
    %p118 = scmp.eq.s32.totalorder %s10, 0
    %p119 = por %p117, %p118
    %p120 = scmp.ne.s32.totalorder %s109, %s112
    %p121 = scmp.eq.s32.totalorder %s15, 7
    %p122 = por %p120, %p121
    %p123 = scmp.ne.s32.totalorder %s112, %s113
    %p124 = scmp.eq.s32.totalorder %s15, 0
    %p125 = por %p123, %p124
    %p126 = scmp.ne.s32.totalorder %s112, %s113
    %p127 = scmp.eq.s32.totalorder %s16, 7
    %p128 = por %p126, %p127
    %p130 = scmp.ne.s32.totalorder %s113, %s129
    %p131 = scmp.eq.s32.totalorder %s16, 0
    %p132 = por %p130, %p131
    %p133 = scmp.le.s32.totalorder 1, %s10
    %p134 = scmp.lt.s32.totalorder %s10, 9
    %p135 = pnand %p133, %p134
    %p136 = pneg %p135
    // Predicated region
    $region9: #{conv2d_nhwc.1} parent=5 // pred_check
      _
    $region10: #{conv2d_nhwc.1} parent=5 // pred_check_branch
      %138 = sbr.rel (%p135) target = $region12
    $region11: #{conv2d_nhwc.1} parent=5 // pred_region
      %s139 = ssub.s32 %s10, 1
      // Predicated region
      $region13: #{conv2d_nhwc.1} parent=11 // pred_check
        %p140 = pneg %p57
      $region14: #{conv2d_nhwc.1} parent=11 // pred_check_branch
        %142 = sbr.rel (%p140) target = $region16
      $region15: #{conv2d_nhwc.1} parent=11 // pred_region
        _
      $region16: #{conv2d_nhwc.1} parent=11 // pred_fallthru
        _
      // Predicated region
      $region17: #{conv2d_nhwc.1} parent=11 // pred_check
        %p143 = pneg %p78
      $region18: #{conv2d_nhwc.1} parent=11 // pred_check_branch
        %145 = sbr.rel (%p143) target = $region20
      $region19: #{conv2d_nhwc.1} parent=11 // pred_region
        _
      $region20: #{conv2d_nhwc.1} parent=11 // pred_fallthru
        _
      // Predicated region
      $region21: #{conv2d_nhwc.1} parent=11 // pred_check
        %p146 = pneg %p99
      $region22: #{conv2d_nhwc.1} parent=11 // pred_check_branch
        %148 = sbr.rel (%p146) target = $region24
      $region23: #{conv2d_nhwc.1} parent=11 // pred_region
        _
      $region24: #{conv2d_nhwc.1} parent=11 // pred_fallthru
        _
    $region12: #{conv2d_nhwc.1} parent=5 // pred_fallthru
      _
    %p149 = scmp.lt.s32.totalorder %s10, 8
    // Predicated region
    $region25: #{conv2d_nhwc.1} parent=5 // pred_check
      %p150 = pneg %p149
    $region26: #{conv2d_nhwc.1} parent=5 // pred_check_branch
      %152 = sbr.rel (%p150) target = $region28
    $region27: #{conv2d_nhwc.1} parent=5 // pred_region
      // Predicated region
      $region29: #{conv2d_nhwc.1} parent=27 // pred_check
        %p153 = pneg %p30
      $region30: #{conv2d_nhwc.1} parent=27 // pred_check_branch
        %155 = sbr.rel (%p153) target = $region32
      $region31: #{conv2d_nhwc.1} parent=27 // pred_region
        %s156 = smul.u32 32, %s10
        %p157 = scmp.lt.s32.totalorder %s156, 255
        %s158 = scalar_select %p157, %s156, 255
        %s159 = smul.addr %s158, 4
        %s160 = scalar_lea.vmem %s0, %s159
        %s161 = smul.u32 32, %s10
      $region32: #{conv2d_nhwc.1} parent=27 // pred_fallthru
        _
    $region28: #{conv2d_nhwc.1} parent=5 // pred_fallthru
      _
    %p162 = scmp.le.s32.totalorder 1, %s10
    %p163 = scmp.lt.s32.totalorder %s10, 9
    %p164 = pnand %p162, %p163
    %p165 = pneg %p164
    // Predicated region
    $region33: #{conv2d_nhwc.1} parent=5 // pred_check
      _
    $region34: #{conv2d_nhwc.1} parent=5 // pred_check_branch
      %167 = sbr.rel (%p164) target = $region36
    $region35: #{conv2d_nhwc.1} parent=5 // pred_region
      %s168 = ssub.s32 %s10, 1
      %s169 = smul.u32 32, %s15
      %p170 = scmp.lt.s32.totalorder %s169, 255
      %s171 = scalar_select %p170, %s169, 255
      %s172 = smul.addr %s171, 4
      %s173 = scalar_lea.vmem %s0, %s172
      %p174 = pneg %p36
      %p175 = pneg %p33
      %p176 = pneg %p57
      %p177 = pneg %p54
      %p178 = pneg %p78
      %p179 = pneg %p75
      %p180 = pneg %p99
      %p181 = pneg %p96
      %p182 = pneg %p125
      %p183 = pneg %p122
      %s184 = smul.u32 32, %s15
      %p185 = scmp.lt.s32.totalorder %s184, 255
      %s186 = scalar_select %p185, %s184, 255
      %s187 = smul.addr %s186, 4
      %s188 = scalar_lea.vmem %s4, %s187
      %s189 = smul.u32 32, %s15
      %p190 = scmp.lt.s32.totalorder %s189, 255
      %s191 = scalar_select %p190, %s189, 255
      %s192 = smul.addr %s191, 4
      %s193 = scalar_lea.vmem %s0, %s192
      %s194 = smul.u32 32, %s15
      %s195 = smul.u32 32, %s15
      %p196 = scmp.lt.s32.totalorder %s195, 255
      %s197 = scalar_select %p196, %s195, 255
      %s198 = smul.addr %s197, 4
      %s199 = scalar_lea.vmem %s4, %s198
      %s200 = smul.u32 32, %s15
      %v202 = vld [vmem:[%s193] sm:$0xf]
      %v203 = vld [vmem:[%s193 + $0x4] sm:$0xf]
      %v204 = vld [vmem:[%s193 + $0x8] sm:$0xf]
      %v205 = vld [vmem:[%s193 + $0xc] sm:$0xf]
      %v206 = vld [vmem:[%s193 + $0x10] sm:$0xf]
      %v207 = vld [vmem:[%s193 + $0x14] sm:$0xf]
      %v208 = vld [vmem:[%s193 + $0x18] sm:$0xf]
      %v209 = vld [vmem:[%s193 + $0x1c] sm:$0xf]
      %v210 = vld [vmem:[%s193 + $0x20] sm:$0xf]
      %v211 = vld [vmem:[%s193 + $0x24] sm:$0xf]
      %v212 = vld [vmem:[%s193 + $0x28] sm:$0xf]
      %v213 = vld [vmem:[%s193 + $0x2c] sm:$0xf]
      %v214 = vld [vmem:[%s193 + $0x30] sm:$0xf]
      %v215 = vld [vmem:[%s193 + $0x34] sm:$0xf]
      %v216 = vld [vmem:[%s193 + $0x38] sm:$0xf]
      %v217 = vld [vmem:[%s193 + $0x3c] sm:$0xf]
      %v218 = vld [vmem:[%s193 + $0x40] sm:$0xf]
      %v219 = vld [vmem:[%s193 + $0x44] sm:$0xf]
      %v220 = vld [vmem:[%s193 + $0x48] sm:$0xf]
      %v221 = vld [vmem:[%s193 + $0x4c] sm:$0xf]
      %v222 = vld [vmem:[%s193 + $0x50] sm:$0xf]
      %v223 = vld [vmem:[%s193 + $0x54] sm:$0xf]
      %v224 = vld [vmem:[%s193 + $0x58] sm:$0xf]
      %v225 = vld [vmem:[%s193 + $0x5c] sm:$0xf]
      %v226 = vld [vmem:[%s193 + $0x60] sm:$0xf]
      %v227 = vld [vmem:[%s193 + $0x64] sm:$0xf]
      %v228 = vld [vmem:[%s193 + $0x68] sm:$0xf]
      %v229 = vld [vmem:[%s193 + $0x6c] sm:$0xf]
      %v230 = vld [vmem:[%s193 + $0x70] sm:$0xf]
      %v231 = vld [vmem:[%s193 + $0x74] sm:$0xf]
      %v232 = vld [vmem:[%s193 + $0x78] sm:$0xf]
      %v233 = vld [vmem:[%s193 + $0x7c] sm:$0xf]
      %v234 = vld [vmem:[%s1] sm:$0xf]
      %v235 = vld [vmem:[%s1 + $0x4] sm:$0xf]
      %v236 = vld [vmem:[%s1 + $0x8] sm:$0xf]
      %v237 = vld [vmem:[%s1 + $0xc] sm:$0x3]
      %v270 = vunpack.c.l.b16 %v202
      %v271 = vunpack.c.l.b16 %v203
      %v272 = vunpack.c.l.b16 %v204
      %v273 = vunpack.c.l.b16 %v205
      %v274 = vunpack.c.l.b16 %v206
      %v275 = vunpack.c.l.b16 %v207
      %v276 = vunpack.c.l.b16 %v208
      %v277 = vunpack.c.l.b16 %v209
      %v278 = vunpack.c.l.b16 %v210
      %v279 = vunpack.c.l.b16 %v211
      %v280 = vunpack.c.l.b16 %v212
      %v281 = vunpack.c.l.b16 %v213
      %v282 = vunpack.c.l.b16 %v214
      %v283 = vunpack.c.l.b16 %v215
      %v284 = vunpack.c.l.b16 %v216
      %v285 = vunpack.c.l.b16 %v217
      %v286 = vunpack.c.l.b16 %v218
      %v287 = vunpack.c.l.b16 %v219
      %v288 = vunpack.c.l.b16 %v220
      %v289 = vunpack.c.l.b16 %v221
      %v290 = vunpack.c.l.b16 %v222
      %v291 = vunpack.c.l.b16 %v223
      %v292 = vunpack.c.l.b16 %v224
      %v293 = vunpack.c.l.b16 %v225
      %v294 = vunpack.c.l.b16 %v226
      %v295 = vunpack.c.l.b16 %v227
      %v296 = vunpack.c.l.b16 %v228
      %v297 = vunpack.c.l.b16 %v229
      %v298 = vunpack.c.l.b16 %v230
      %v299 = vunpack.c.l.b16 %v231
      %v300 = vunpack.c.l.b16 %v232
      %v301 = vunpack.c.l.b16 %v233
      %v302 = vpack.c.b16 %v271, %v270
      %v303 = vpack.c.b16 %v273, %v272
      %v304 = vpack.c.b16 %v275, %v274
      %v305 = vpack.c.b16 %v277, %v276
      %v306 = vpack.c.b16 %v279, %v278
      %v307 = vpack.c.b16 %v281, %v280
      %v308 = vpack.c.b16 %v283, %v282
      %v309 = vpack.c.b16 %v285, %v284
      %v310 = vpack.c.b16 %v287, %v286
      %v311 = vpack.c.b16 %v289, %v288
      %v312 = vpack.c.b16 %v291, %v290
      %v313 = vpack.c.b16 %v293, %v292
      %v314 = vpack.c.b16 %v295, %v294
      %v315 = vpack.c.b16 %v297, %v296
      %v316 = vpack.c.b16 %v299, %v298
      %v317 = vpack.c.b16 %v301, %v300
      %v322 = vunpack.c.l.b16 %v234
      %v323 = vunpack.c.l.b16 %v235
      %v324 = vunpack.c.l.b16 %v236
      %v325 = vunpack.c.l.b16 %v237
      %v326 = vpack.c.b16 %v323, %v322
      %v327 = vpack.c.b16 %v325, %v324
      %vm329 = vcmask 220160
      %v331 = vsel %vm329, %v302, 0
      %v334 = vsel %vm329, %v303, 0
      %v337 = vsel %vm329, %v304, 0
      %v340 = vsel %vm329, %v305, 0
      %v343 = vsel %vm329, %v306, 0
      %v346 = vsel %vm329, %v307, 0
      %v349 = vsel %vm329, %v308, 0
      %v352 = vsel %vm329, %v309, 0
      %v355 = vsel %vm329, %v310, 0
      %v358 = vsel %vm329, %v311, 0
      %v361 = vsel %vm329, %v312, 0
      %v364 = vsel %vm329, %v313, 0
      %v367 = vsel %vm329, %v314, 0
      %v370 = vsel %vm329, %v315, 0
      %v373 = vsel %vm329, %v316, 0
      %v376 = vsel %vm329, %v317, 0
      %vm378 = vcmask 1044480
      %vm379 = vcmask 1045504
      %v380 = vsel %vm378, 4294967295, 65535
      %v381 = vsel %vm379, %v380, 0
      %v383 = vand.u32 %v327, %v381
      %385 = vmatprep.subr.bf16.mxu0 0
      %386 = vmatpush1.bf16.msra.mxu0 %v326
      %387 = vmatprep.subr.bf16.mxu0 0
      %388 = vmatpush1.bf16.msra.mxu0 %v383
      %389 = vmatprep.subr.bf16.mxu0 0
      %390 = vmatpush1.bf16.msra.mxu0 0
      %391 = vmatprep.subr.bf16.mxu0 0
      %392 = vmatpush1.bf16.msra.mxu0 0
      %393 = vmatprep.subr.bf16.mxu0 0
      %394 = vmatpush1.bf16.msra.mxu0 0
      %395 = vmatprep.subr.bf16.mxu0 0
      %396 = vmatpush1.bf16.msra.mxu0 0
      %397 = vmatprep.subr.bf16.mxu0 0
      %398 = vmatpush1.bf16.msra.mxu0 0
      %399 = vmatprep.subr.bf16.mxu0 0
      %400 = vmatpush1.bf16.msra.mxu0 0
      %401 = vmatprep.subr.bf16.mxu0 0
      %402 = vmatpush1.bf16.msra.mxu0 0
      %403 = vmatprep.subr.bf16.mxu0 0
      %404 = vmatpush1.bf16.msra.mxu0 0
      %405 = vmatprep.subr.bf16.mxu0 0
      %406 = vmatpush1.bf16.msra.mxu0 0
      %407 = vmatprep.subr.bf16.mxu0 0
      %408 = vmatpush1.bf16.msra.mxu0 0
      %409 = vmatprep.subr.bf16.mxu0 0
      %410 = vmatpush1.bf16.msra.mxu0 0
      %411 = vmatprep.subr.bf16.mxu0 0
      %412 = vmatpush1.bf16.msra.mxu0 0
      %413 = vmatprep.subr.bf16.mxu0 0
      %414 = vmatpush1.bf16.msra.mxu0 0
      %415 = vmatprep.subr.bf16.mxu0 0
      %416 = vmatpush1.bf16.msra.mxu0 0
      %417 = vmatprep.mubr.bf16.mxu0 0
      %418 = vmatmul.mubr.bf16.gmra.mrb[0].mxu0 %v331
      %v419 = vpop.f32.mrb[0].mxu0
      %v420 = vadd.f32 0.0, %v419
      %v421 = vpop.f32.mrb[0].mxu0
      %v422 = vpop.f32.mrb[0].mxu0
      %v423 = vadd.f32 0.0, %v422
      %v424 = vpop.f32.mrb[0].mxu0
      %425 = vmatprep.mubr.bf16.mxu0 0
      %426 = vmatmul.mubr.bf16.gmra.mrb[0].mxu0 %v334
      %v427 = vpop.f32.mrb[0].mxu0
      %v428 = vadd.f32 0.0, %v427
      %v429 = vpop.f32.mrb[0].mxu0
      %v430 = vpop.f32.mrb[0].mxu0
      %v431 = vadd.f32 0.0, %v430
      %v432 = vpop.f32.mrb[0].mxu0
      %433 = vmatprep.mubr.bf16.mxu0 0
      %434 = vmatmul.mubr.bf16.gmra.mrb[0].mxu0 %v337
      %v435 = vpop.f32.mrb[0].mxu0
      %v436 = vadd.f32 0.0, %v435
      %v437 = vpop.f32.mrb[0].mxu0
      %v438 = vpop.f32.mrb[0].mxu0
      %v439 = vadd.f32 0.0, %v438
      %v440 = vpop.f32.mrb[0].mxu0
      %441 = vmatprep.mubr.bf16.mxu0 0
      %442 = vmatmul.mubr.bf16.gmra.mrb[0].mxu0 %v340
      %v443 = vpop.f32.mrb[0].mxu0
      %v444 = vadd.f32 0.0, %v443
      %v445 = vpop.f32.mrb[0].mxu0
      %v446 = vpop.f32.mrb[0].mxu0
      %v447 = vadd.f32 0.0, %v446
      %v448 = vpop.f32.mrb[0].mxu0
      %449 = vmatprep.mubr.bf16.mxu0 0
      %450 = vmatmul.mubr.bf16.gmra.mrb[0].mxu0 %v343
      %v451 = vpop.f32.mrb[0].mxu0
      %v452 = vadd.f32 0.0, %v451
      %v453 = vpop.f32.mrb[0].mxu0
      %v454 = vpop.f32.mrb[0].mxu0
      %v455 = vadd.f32 0.0, %v454
      %v456 = vpop.f32.mrb[0].mxu0
      %457 = vmatprep.mubr.bf16.mxu0 0
      %458 = vmatmul.mubr.bf16.gmra.mrb[0].mxu0 %v346
      %v459 = vpop.f32.mrb[0].mxu0
      %v460 = vadd.f32 0.0, %v459
      %v461 = vpop.f32.mrb[0].mxu0
      %v462 = vpop.f32.mrb[0].mxu0
      %v463 = vadd.f32 0.0, %v462
      %v464 = vpop.f32.mrb[0].mxu0
      %465 = vmatprep.mubr.bf16.mxu0 0
      %466 = vmatmul.mubr.bf16.gmra.mrb[0].mxu0 %v349
      %v467 = vpop.f32.mrb[0].mxu0
      %v468 = vadd.f32 0.0, %v467
      %v469 = vpop.f32.mrb[0].mxu0
      %v470 = vpop.f32.mrb[0].mxu0
      %v471 = vadd.f32 0.0, %v470
      %v472 = vpop.f32.mrb[0].mxu0
      %473 = vmatprep.mubr.bf16.mxu0 0
      %474 = vmatmul.mubr.bf16.gmra.mrb[0].mxu0 %v352
      %v475 = vpop.f32.mrb[0].mxu0
      %v476 = vadd.f32 0.0, %v475
      %v477 = vpop.f32.mrb[0].mxu0
      %v478 = vpop.f32.mrb[0].mxu0
      %v479 = vadd.f32 0.0, %v478
      %v480 = vpop.f32.mrb[0].mxu0
      %481 = vmatprep.mubr.bf16.mxu0 0
      %482 = vmatmul.mubr.bf16.gmra.mrb[0].mxu0 %v355
      %v483 = vpop.f32.mrb[0].mxu0
      %v484 = vadd.f32 0.0, %v483
      %v485 = vpop.f32.mrb[0].mxu0
      %v486 = vpop.f32.mrb[0].mxu0
      %v487 = vadd.f32 0.0, %v486
      %v488 = vpop.f32.mrb[0].mxu0
      %489 = vmatprep.mubr.bf16.mxu0 0
      %490 = vmatmul.mubr.bf16.gmra.mrb[0].mxu0 %v358
      %v491 = vpop.f32.mrb[0].mxu0
      %v492 = vadd.f32 0.0, %v491
      %v493 = vpop.f32.mrb[0].mxu0
      %v494 = vpop.f32.mrb[0].mxu0
      %v495 = vadd.f32 0.0, %v494
      %v496 = vpop.f32.mrb[0].mxu0
      %497 = vmatprep.mubr.bf16.mxu0 0
      %498 = vmatmul.mubr.bf16.gmra.mrb[0].mxu0 %v361
      %v499 = vpop.f32.mrb[0].mxu0
      %v500 = vadd.f32 0.0, %v499
      %v501 = vpop.f32.mrb[0].mxu0
      %v502 = vpop.f32.mrb[0].mxu0
      %v503 = vadd.f32 0.0, %v502
      %v504 = vpop.f32.mrb[0].mxu0
      %505 = vmatprep.mubr.bf16.mxu0 0
      %506 = vmatmul.mubr.bf16.gmra.mrb[0].mxu0 %v364
      %v507 = vpop.f32.mrb[0].mxu0
      %v508 = vadd.f32 0.0, %v507
      %v509 = vpop.f32.mrb[0].mxu0
      %v510 = vpop.f32.mrb[0].mxu0
      %v511 = vadd.f32 0.0, %v510
      %v512 = vpop.f32.mrb[0].mxu0
      %513 = vmatprep.mubr.bf16.mxu0 0
      %514 = vmatmul.mubr.bf16.gmra.mrb[0].mxu0 %v367
      %v515 = vpop.f32.mrb[0].mxu0
      %v516 = vadd.f32 0.0, %v515
      %v517 = vpop.f32.mrb[0].mxu0
      %v518 = vpop.f32.mrb[0].mxu0
      %v519 = vadd.f32 0.0, %v518
      %v520 = vpop.f32.mrb[0].mxu0
      %521 = vmatprep.mubr.bf16.mxu0 0
      %522 = vmatmul.mubr.bf16.gmra.mrb[0].mxu0 %v370
      %v523 = vpop.f32.mrb[0].mxu0
      %v524 = vadd.f32 0.0, %v523
      %v525 = vpop.f32.mrb[0].mxu0
      %v526 = vpop.f32.mrb[0].mxu0
      %v527 = vadd.f32 0.0, %v526
      %v528 = vpop.f32.mrb[0].mxu0
      %529 = vmatprep.mubr.bf16.mxu0 0
      %530 = vmatmul.mubr.bf16.gmra.mrb[0].mxu0 %v373
      %v531 = vpop.f32.mrb[0].mxu0
      %v532 = vadd.f32 0.0, %v531
      %v533 = vpop.f32.mrb[0].mxu0
      %v534 = vpop.f32.mrb[0].mxu0
      %v535 = vadd.f32 0.0, %v534
      %v536 = vpop.f32.mrb[0].mxu0
      %537 = vmatprep.mubr.bf16.mxu0 0
      %538 = vmatmul.mubr.bf16.gmra.mrb[0].mxu0 %v376
      %v539 = vpop.f32.mrb[0].mxu0
      %v540 = vadd.f32 0.0, %v539
      %v541 = vpop.f32.mrb[0].mxu0
      %v542 = vpop.f32.mrb[0].mxu0
      %v543 = vadd.f32 0.0, %v542
      %v544 = vpop.f32.mrb[0].mxu0
      %545 = vdwg.mxu0
      %v546 = vld [vmem:[%s2] sm:$0x1]
      %v548 = vlaneseq
      %v549 = vshrl.u32 %v548, 7
      %v550 = vsub.s32 0, %v549
      %v551 = vrot.slane %v546, %v550
      %v553 = vmul.f32 %v420, %v551
      %v554 = vmul.f32 %v423, %v551
      %v555 = vmul.f32 %v428, %v551
      %v556 = vmul.f32 %v431, %v551
      %v557 = vmul.f32 %v436, %v551
      %v558 = vmul.f32 %v439, %v551
      %v559 = vmul.f32 %v444, %v551
      %v560 = vmul.f32 %v447, %v551
      %v561 = vmul.f32 %v452, %v551
      %v562 = vmul.f32 %v455, %v551
      %v563 = vmul.f32 %v460, %v551
      %v564 = vmul.f32 %v463, %v551
      %v565 = vmul.f32 %v468, %v551
      %v566 = vmul.f32 %v471, %v551
      %v567 = vmul.f32 %v476, %v551
      %v568 = vmul.f32 %v479, %v551
      %v569 = vmul.f32 %v484, %v551
      %v570 = vmul.f32 %v487, %v551
      %v571 = vmul.f32 %v492, %v551
      %v572 = vmul.f32 %v495, %v551
      %v573 = vmul.f32 %v500, %v551
      %v574 = vmul.f32 %v503, %v551
      %v575 = vmul.f32 %v508, %v551
      %v576 = vmul.f32 %v511, %v551
      %v577 = vmul.f32 %v516, %v551
      %v578 = vmul.f32 %v519, %v551
      %v579 = vmul.f32 %v524, %v551
      %v580 = vmul.f32 %v527, %v551
      %v581 = vmul.f32 %v532, %v551
      %v582 = vmul.f32 %v535, %v551
      %v583 = vmul.f32 %v540, %v551
      %v584 = vmul.f32 %v543, %v551
      %v585 = vld [vmem:[%s3] sm:$0x1]
      %v587 = vlaneseq
      %v588 = vshrl.u32 %v587, 7
      %v589 = vsub.s32 0, %v588
      %v590 = vrot.slane %v585, %v589
      %v592 = vadd.f32 %v553, %v590
      %v593 = vadd.f32 %v554, %v590
      %v594 = vadd.f32 %v555, %v590
      %v595 = vadd.f32 %v556, %v590
      %v596 = vadd.f32 %v557, %v590
      %v597 = vadd.f32 %v558, %v590
      %v598 = vadd.f32 %v559, %v590
      %v599 = vadd.f32 %v560, %v590
      %v600 = vadd.f32 %v561, %v590
      %v601 = vadd.f32 %v562, %v590
      %v602 = vadd.f32 %v563, %v590
      %v603 = vadd.f32 %v564, %v590
      %v604 = vadd.f32 %v565, %v590
      %v605 = vadd.f32 %v566, %v590
      %v606 = vadd.f32 %v567, %v590
      %v607 = vadd.f32 %v568, %v590
      %v608 = vadd.f32 %v569, %v590
      %v609 = vadd.f32 %v570, %v590
      %v610 = vadd.f32 %v571, %v590
      %v611 = vadd.f32 %v572, %v590
      %v612 = vadd.f32 %v573, %v590
      %v613 = vadd.f32 %v574, %v590
      %v614 = vadd.f32 %v575, %v590
      %v615 = vadd.f32 %v576, %v590
      %v616 = vadd.f32 %v577, %v590
      %v617 = vadd.f32 %v578, %v590
      %v618 = vadd.f32 %v579, %v590
      %v619 = vadd.f32 %v580, %v590
      %v620 = vadd.f32 %v581, %v590
      %v621 = vadd.f32 %v582, %v590
      %v622 = vadd.f32 %v583, %v590
      %v623 = vadd.f32 %v584, %v590
      %v624 = vmax.f32 %v592, 0.0
      %v625 = vmax.f32 %v593, 0.0
      %v626 = vmax.f32 %v594, 0.0
      %v627 = vmax.f32 %v595, 0.0
      %v628 = vmax.f32 %v596, 0.0
      %v629 = vmax.f32 %v597, 0.0
      %v630 = vmax.f32 %v598, 0.0
      %v631 = vmax.f32 %v599, 0.0
      %v632 = vmax.f32 %v600, 0.0
      %v633 = vmax.f32 %v601, 0.0
      %v634 = vmax.f32 %v602, 0.0
      %v635 = vmax.f32 %v603, 0.0
      %v636 = vmax.f32 %v604, 0.0
      %v637 = vmax.f32 %v605, 0.0
      %v638 = vmax.f32 %v606, 0.0
      %v639 = vmax.f32 %v607, 0.0
      %v640 = vmax.f32 %v608, 0.0
      %v641 = vmax.f32 %v609, 0.0
      %v642 = vmax.f32 %v610, 0.0
      %v643 = vmax.f32 %v611, 0.0
      %v644 = vmax.f32 %v612, 0.0
      %v645 = vmax.f32 %v613, 0.0
      %v646 = vmax.f32 %v614, 0.0
      %v647 = vmax.f32 %v615, 0.0
      %v648 = vmax.f32 %v616, 0.0
      %v649 = vmax.f32 %v617, 0.0
      %v650 = vmax.f32 %v618, 0.0
      %v651 = vmax.f32 %v619, 0.0
      %v652 = vmax.f32 %v620, 0.0
      %v653 = vmax.f32 %v621, 0.0
      %v654 = vmax.f32 %v622, 0.0
      %v655 = vmax.f32 %v623, 0.0
      %v656 = vpack.c.bf16 %v625, %v624
      %v657 = vpack.c.bf16 %v627, %v626
      %v658 = vpack.c.bf16 %v629, %v628
      %v659 = vpack.c.bf16 %v631, %v630
      %v660 = vpack.c.bf16 %v633, %v632
      %v661 = vpack.c.bf16 %v635, %v634
      %v662 = vpack.c.bf16 %v637, %v636
      %v663 = vpack.c.bf16 %v639, %v638
      %v664 = vpack.c.bf16 %v641, %v640
      %v665 = vpack.c.bf16 %v643, %v642
      %v666 = vpack.c.bf16 %v645, %v644
      %v667 = vpack.c.bf16 %v647, %v646
      %v668 = vpack.c.bf16 %v649, %v648
      %v669 = vpack.c.bf16 %v651, %v650
      %v670 = vpack.c.bf16 %v653, %v652
      %v671 = vpack.c.bf16 %v655, %v654
      %v688 = vunpack.c.l.b16 %v656
      %v689 = vunpack.c.h.b16 %v656
      %v690 = vunpack.c.l.b16 %v657
      %v691 = vunpack.c.h.b16 %v657
      %v692 = vunpack.c.l.b16 %v658
      %v693 = vunpack.c.h.b16 %v658
      %v694 = vunpack.c.l.b16 %v659
      %v695 = vunpack.c.h.b16 %v659
      %v696 = vunpack.c.l.b16 %v660
      %v697 = vunpack.c.h.b16 %v660
      %v698 = vunpack.c.l.b16 %v661
      %v699 = vunpack.c.h.b16 %v661
      %v700 = vunpack.c.l.b16 %v662
      %v701 = vunpack.c.h.b16 %v662
      %v702 = vunpack.c.l.b16 %v663
      %v703 = vunpack.c.h.b16 %v663
      %v704 = vunpack.c.l.b16 %v664
      %v705 = vunpack.c.h.b16 %v664
      %v706 = vunpack.c.l.b16 %v665
      %v707 = vunpack.c.h.b16 %v665
      %v708 = vunpack.c.l.b16 %v666
      %v709 = vunpack.c.h.b16 %v666
      %v710 = vunpack.c.l.b16 %v667
      %v711 = vunpack.c.h.b16 %v667
      %v712 = vunpack.c.l.b16 %v668
      %v713 = vunpack.c.h.b16 %v668
      %v714 = vunpack.c.l.b16 %v669
      %v715 = vunpack.c.h.b16 %v669
      %v716 = vunpack.c.l.b16 %v670
      %v717 = vunpack.c.h.b16 %v670
      %v718 = vunpack.c.l.b16 %v671
      %v719 = vunpack.c.h.b16 %v671
      %v720 = vpack.c.b16 %v688, %v688
      %v721 = vpack.c.b16 %v689, %v689
      %v722 = vpack.c.b16 %v690, %v690
      %v723 = vpack.c.b16 %v691, %v691
      %v724 = vpack.c.b16 %v692, %v692
      %v725 = vpack.c.b16 %v693, %v693
      %v726 = vpack.c.b16 %v694, %v694
      %v727 = vpack.c.b16 %v695, %v695
      %v728 = vpack.c.b16 %v696, %v696
      %v729 = vpack.c.b16 %v697, %v697
      %v730 = vpack.c.b16 %v698, %v698
      %v731 = vpack.c.b16 %v699, %v699
      %v732 = vpack.c.b16 %v700, %v700
      %v733 = vpack.c.b16 %v701, %v701
      %v734 = vpack.c.b16 %v702, %v702
      %v735 = vpack.c.b16 %v703, %v703
      %v736 = vpack.c.b16 %v704, %v704
      %v737 = vpack.c.b16 %v705, %v705
      %v738 = vpack.c.b16 %v706, %v706
      %v739 = vpack.c.b16 %v707, %v707
      %v740 = vpack.c.b16 %v708, %v708
      %v741 = vpack.c.b16 %v709, %v709
      %v742 = vpack.c.b16 %v710, %v710
      %v743 = vpack.c.b16 %v711, %v711
      %v744 = vpack.c.b16 %v712, %v712
      %v745 = vpack.c.b16 %v713, %v713
      %v746 = vpack.c.b16 %v714, %v714
      %v747 = vpack.c.b16 %v715, %v715
      %v748 = vpack.c.b16 %v716, %v716
      %v749 = vpack.c.b16 %v717, %v717
      %v750 = vpack.c.b16 %v718, %v718
      %v751 = vpack.c.b16 %v719, %v719
      %vm784 = vcmask 125952
      %785 = vst.msk [vmem:[%s199] sm:$0xf] %vm784, %v720
      %786 = vst.msk [vmem:[%s199 + $0x4] sm:$0xf] %vm784, %v721
      %787 = vst.msk [vmem:[%s199 + $0x8] sm:$0xf] %vm784, %v722
      %788 = vst.msk [vmem:[%s199 + $0xc] sm:$0xf] %vm784, %v723
      %789 = vst.msk [vmem:[%s199 + $0x10] sm:$0xf] %vm784, %v724
      %790 = vst.msk [vmem:[%s199 + $0x14] sm:$0xf] %vm784, %v725
      %791 = vst.msk [vmem:[%s199 + $0x18] sm:$0xf] %vm784, %v726
      %792 = vst.msk [vmem:[%s199 + $0x1c] sm:$0xf] %vm784, %v727
      %793 = vst.msk [vmem:[%s199 + $0x20] sm:$0xf] %vm784, %v728
      %794 = vst.msk [vmem:[%s199 + $0x24] sm:$0xf] %vm784, %v729
      %795 = vst.msk [vmem:[%s199 + $0x28] sm:$0xf] %vm784, %v730
      %796 = vst.msk [vmem:[%s199 + $0x2c] sm:$0xf] %vm784, %v731
      %797 = vst.msk [vmem:[%s199 + $0x30] sm:$0xf] %vm784, %v732
      %798 = vst.msk [vmem:[%s199 + $0x34] sm:$0xf] %vm784, %v733
      %799 = vst.msk [vmem:[%s199 + $0x38] sm:$0xf] %vm784, %v734
      %800 = vst.msk [vmem:[%s199 + $0x3c] sm:$0xf] %vm784, %v735
      %801 = vst.msk [vmem:[%s199 + $0x40] sm:$0xf] %vm784, %v736
      %802 = vst.msk [vmem:[%s199 + $0x44] sm:$0xf] %vm784, %v737
      %803 = vst.msk [vmem:[%s199 + $0x48] sm:$0xf] %vm784, %v738
      %804 = vst.msk [vmem:[%s199 + $0x4c] sm:$0xf] %vm784, %v739
      %805 = vst.msk [vmem:[%s199 + $0x50] sm:$0xf] %vm784, %v740
      %806 = vst.msk [vmem:[%s199 + $0x54] sm:$0xf] %vm784, %v741
      %807 = vst.msk [vmem:[%s199 + $0x58] sm:$0xf] %vm784, %v742
      %808 = vst.msk [vmem:[%s199 + $0x5c] sm:$0xf] %vm784, %v743
      %809 = vst.msk [vmem:[%s199 + $0x60] sm:$0xf] %vm784, %v744
      %810 = vst.msk [vmem:[%s199 + $0x64] sm:$0xf] %vm784, %v745
      %811 = vst.msk [vmem:[%s199 + $0x68] sm:$0xf] %vm784, %v746
      %812 = vst.msk [vmem:[%s199 + $0x6c] sm:$0xf] %vm784, %v747
      %813 = vst.msk [vmem:[%s199 + $0x70] sm:$0xf] %vm784, %v748
      %814 = vst.msk [vmem:[%s199 + $0x74] sm:$0xf] %vm784, %v749
      %815 = vst.msk [vmem:[%s199 + $0x78] sm:$0xf] %vm784, %v750
      %816 = vst.msk [vmem:[%s199 + $0x7c] sm:$0xf] %vm784, %v751
      %s817 = smul.u32 32, %s15
      %p818 = scmp.lt.s32.totalorder %s817, 255
      %s819 = scalar_select %p818, %s817, 255
      %s820 = smul.addr %s819, 4
      %s821 = scalar_lea.vmem %s4, %s820
      // Predicated region
      $region37: #{conv2d_nhwc.1} parent=35 // pred_check
        %p822 = pneg %p122
      $region38: #{conv2d_nhwc.1} parent=35 // pred_check_branch
        %824 = sbr.rel (%p822) target = $region40
      $region39: #{conv2d_nhwc.1} parent=35 // pred_region
        %s825 = smul.u32 32, %s15
      $region40: #{conv2d_nhwc.1} parent=35 // pred_fallthru
        _
    $region36: #{conv2d_nhwc.1} parent=5 // pred_fallthru
      _
    %p826 = scmp.le.s32.totalorder 2, %s10
    // Predicated region
    $region41: #{conv2d_nhwc.1} parent=5 // pred_check
      %p827 = pneg %p826
    $region42: #{conv2d_nhwc.1} parent=5 // pred_check_branch
      %829 = sbr.rel (%p827) target = $region44
    $region43: #{conv2d_nhwc.1} parent=5 // pred_region
      %s830 = ssub.s32 %s10, 2
      // Predicated region
      $region45: #{conv2d_nhwc.1} parent=43 // pred_check
        %p831 = pneg %p128
      $region46: #{conv2d_nhwc.1} parent=43 // pred_check_branch
        %833 = sbr.rel (%p831) target = $region48
      $region47: #{conv2d_nhwc.1} parent=43 // pred_region
        %s834 = smul.u32 32, %s16
        %p835 = scmp.lt.s32.totalorder %s834, 255
        %s836 = scalar_select %p835, %s834, 255
        %s837 = smul.addr %s836, 4
        %s838 = scalar_lea.vmem %s4, %s837
      $region48: #{conv2d_nhwc.1} parent=43 // pred_fallthru
        _
    $region44: #{conv2d_nhwc.1} parent=5 // pred_fallthru
      _
  $region6: #{conv2d_nhwc.1} parent=0 // loop_footer
    %s14 = sadd.s32 1, %s10
  $region7: #{conv2d_nhwc.1} parent=0 // loop_footer_branch
    %9 = sbr.rel target = $region3
  $region8: #{conv2d_nhwc.1} parent=0 // loop_exit
    _

</llo_original>
